<compile_context>
chip_gen: v5e
topology: v5e:2x2
jax: 0.10.0
libtpu: 0.0.40
codegen_flags: <defaults>
</compile_context>

<pallas_src>
import functools

import jax
import jax.numpy as jnp
from jax.experimental import pallas as pl
from jax.experimental.pallas import tpu as pltpu

LANE = 128     # lane width (last dim tiling)
SUBLANE = 8    # sublane width (second-to-last dim tiling)


def _round_up(n, m):
    return ((n + m - 1) // m) * m


# ----------------------------- Pallas kernel ---------------------------------
def mogrifier_lstm_kernel(
    # inputs
    x_ref, h_ref, c_ref,
    wq_t_ref, bq_ref,          # q: hidden -> input      (Hp, Ip), (1, Ip)
    wr_t_ref, br_ref,          # r: input  -> hidden     (Ip, Hp), (1, Hp)
    w_gate_ref, b_gate_ref,    # fused gates [x|h] -> 4H (Ip+Hp, 4Hp), (1, 4Hp)
    # outputs
    h_out_ref, c_out_ref,
    *, mogrify_steps, hp,
):
    x = x_ref[...]             # (Bp, Ip) f32
    h = h_ref[...]             # (Bp, Hp) f32
    c = c_ref[...]             # (Bp, Hp) f32

    wq_t = wq_t_ref[...]
    bq = bq_ref[...]
    wr_t = wr_t_ref[...]
    br = br_ref[...]

    # ---- mogrify: alternating rescaling of x and h -------------------------
    for i in range(1, mogrify_steps + 1):
        if i % 2 == 0:
            r = jnp.dot(x, wr_t, preferred_element_type=jnp.float32) + br
            h = 2.0 * jax.nn.sigmoid(r) * h
        else:
            q = jnp.dot(h, wq_t, preferred_element_type=jnp.float32) + bq
            x = 2.0 * jax.nn.sigmoid(q) * x

    # ---- fused gate matmul: one MXU call on [x | h] -------------------------
    xh = jnp.concatenate([x, h], axis=1)                      # (Bp, Ip+Hp)
    gates = (jnp.dot(xh, w_gate_ref[...], preferred_element_type=jnp.float32)
             + b_gate_ref[...])                               # (Bp, 4*Hp)

    # One full-slab sigmoid pass, then lane-aligned 128-wide slices.
    sig_gates = jax.nn.sigmoid(gates)
    in_gate = sig_gates[:, 0 * hp:1 * hp]
    forget_gate = sig_gates[:, 1 * hp:2 * hp]
    out_gate = sig_gates[:, 3 * hp:4 * hp]
    new_memory = jnp.tanh(gates[:, 2 * hp:3 * hp])

    c_new = forget_gate * c + in_gate * new_memory
    h_new = out_gate * jnp.tanh(c_new)

    h_out_ref[...] = h_new
    c_out_ref[...] = c_new


# ---------------------- one-time parameter preparation -----------------------
def prepare_params(params, input_size, hidden_size):
    """Transpose / pad / fuse the PyTorch-layout weights into kernel layout.

    Done ONCE at model init; the per-call path does no transposes or reshapes.
    """
    I, H = input_size, hidden_size
    Ip = _round_up(I, LANE)
    Hp = _round_up(H, LANE)
    f32 = jnp.float32

    # q: hidden -> input.  PyTorch weight (I, H); kernel uses x @ Wt, Wt (Hp, Ip).
    wq_t = jnp.zeros((Hp, Ip), f32).at[:H, :I].set(params["q_w"].astype(f32).T)
    bq = jnp.zeros((1, Ip), f32).at[0, :I].set(params["q_b"].astype(f32))

    # r: input -> hidden.  PyTorch weight (H, I); Wt (Ip, Hp).
    wr_t = jnp.zeros((Ip, Hp), f32).at[:I, :H].set(params["r_w"].astype(f32).T)
    br = jnp.zeros((1, Hp), f32).at[0, :H].set(params["r_b"].astype(f32))

    # Fused gate weight: [x | h] (Ip + Hp features) -> 4 gates of width Hp each,
    # with x2h_b + h2h_b pre-added into a single bias.
    x2h_w = params["x2h_w"].astype(f32)    # (4H, I)
    h2h_w = params["h2h_w"].astype(f32)    # (4H, H)
    x2h_b = params["x2h_b"].astype(f32)    # (4H,)
    h2h_b = params["h2h_b"].astype(f32)    # (4H,)

    w_gate = jnp.zeros((Ip + Hp, 4 * Hp), f32)
    b_gate = jnp.zeros((1, 4 * Hp), f32)
    for g in range(4):
        w_gate = w_gate.at[:I, g * Hp:g * Hp + H].set(
            x2h_w[g * H:(g + 1) * H, :].T)
        w_gate = w_gate.at[Ip:Ip + H, g * Hp:g * Hp + H].set(
            h2h_w[g * H:(g + 1) * H, :].T)
        b_gate = b_gate.at[0, g * Hp:g * Hp + H].set(
            x2h_b[g * H:(g + 1) * H] + h2h_b[g * H:(g + 1) * H])

    return {
        "wq_t": wq_t, "bq": bq, "wr_t": wr_t, "br": br,
        "w_gate": w_gate, "b_gate": b_gate,
        "I": I, "H": H, "Ip": Ip, "Hp": Hp,
    }


# ------------------------------- cell wrapper ---------------------------------
def mogrifier_lstm_cell(x, states, prepared, mogrify_steps):
    """x: (B, I); states = (h, c) each (B, H). Returns (h_new, c_new)."""
    h, c = states
    B = x.shape[0]
    I, H = prepared["I"], prepared["H"]
    Ip, Hp = prepared["Ip"], prepared["Hp"]
    Bp = _round_up(B, SUBLANE)
    f32 = jnp.float32

    # Zero-pad activations to (sublane, lane) tile-aligned shapes.
    x_p = jnp.zeros((Bp, Ip), f32).at[:B, :I].set(x.astype(f32))
    h_p = jnp.zeros((Bp, Hp), f32).at[:B, :H].set(h.astype(f32))
    c_p = jnp.zeros((Bp, Hp), f32).at[:B, :H].set(c.astype(f32))

    kernel = functools.partial(
        mogrifier_lstm_kernel, mogrify_steps=mogrify_steps, hp=Hp)

    vmem = pl.BlockSpec(memory_space=pltpu.MemorySpace.VMEM)
    h_new_p, c_new_p = pl.pallas_call(
        kernel,
        out_shape=(
            jax.ShapeDtypeStruct((Bp, Hp), f32),
            jax.ShapeDtypeStruct((Bp, Hp), f32),
        ),
        in_specs=[vmem] * 9,
        out_specs=(vmem, vmem),
        # In-place state update: padded h/c inputs alias the h/c outputs.
        input_output_aliases={1: 0, 2: 1},
    )(x_p, h_p, c_p,
      prepared["wq_t"], prepared["bq"],
      prepared["wr_t"], prepared["br"],
      prepared["w_gate"], prepared["b_gate"])

    return (h_new_p[:B, :H].astype(x.dtype),
            c_new_p[:B, :H].astype(x.dtype))


# --------------------------- pure-JAX reference ------------------------------
def reference(x, states, params, mogrify_steps):
    h, c = states
    H = h.shape[1]

    def lin(v, w, b):
        return v @ w.T + b

    for i in range(1, mogrify_steps + 1):
        if i % 2 == 0:
            h = 2.0 * jax.nn.sigmoid(lin(x, params["r_w"], params["r_b"])) * h
        else:
            x = 2.0 * jax.nn.sigmoid(lin(h, params["q_w"], params["q_b"])) * x
    gates = lin(x, params["x2h_w"], params["x2h_b"]) + lin(
        h, params["h2h_w"], params["h2h_b"])
    i_g = jax.nn.sigmoid(gates[:, 0 * H:1 * H])
    f_g = jax.nn.sigmoid(gates[:, 1 * H:2 * H])
    g_g = jnp.tanh(gates[:, 2 * H:3 * H])
    o_g = jax.nn.sigmoid(gates[:, 3 * H:4 * H])
    c_new = f_g * c + i_g * g_g
    h_new = o_g * jnp.tanh(c_new)
    return h_new, c_new


if __name__ == "__main__":
    key = jax.random.PRNGKey(0)
    B, I, H = 2, 32, 32
    mogrify_steps = 5

    # Deterministic parameter init, matching uniform(-std, std), std = 1/sqrt(H).
    std = 1.0 / (H ** 0.5)
    keys = jax.random.split(key, 12)

    def u(k, shape):
        return jax.random.uniform(k, shape, jnp.float32, minval=-std, maxval=std)

    params = {
        "x2h_w": u(keys[0], (4 * H, I)),
        "x2h_b": u(keys[1], (4 * H,)),
        "h2h_w": u(keys[2], (4 * H, H)),
        "h2h_b": u(keys[3], (4 * H,)),
        "q_w": u(keys[4], (I, H)),
        "q_b": u(keys[5], (I,)),
        "r_w": u(keys[6], (H, I)),
        "r_b": u(keys[7], (H,)),
    }

    x = jax.random.normal(keys[8], (B, I), jnp.float32)
    h0 = jax.random.normal(keys[9], (B, H), jnp.float32)
    c0 = jax.random.normal(keys[10], (B, H), jnp.float32)

    # One-time layout of parameters into the kernel format.
    prepared = prepare_params(params, I, H)
    prepared = jax.block_until_ready(prepared)

    h_new, c_new = mogrifier_lstm_cell(x, (h0, c0), prepared, mogrify_steps)
    jax.block_until_ready((h_new, c_new))

    h_ref, c_ref = reference(x, (h0, c0), params, mogrify_steps)
    assert jnp.allclose(h_new, h_ref, atol=1e-5, rtol=1e-5)
    assert jnp.allclose(c_new, c_ref, atol=1e-5, rtol=1e-5)

    print("KERNEL_OK")
</pallas_src>

<mosaic_0001>
module attributes {stable_mosaic.version = 11 : i64} {
  func.func @mogrifier_lstm_kernel(%arg0: memref<8x128xf32, #tpu.memory_space<vmem>>, %arg1: memref<8x128xf32, #tpu.memory_space<vmem>>, %arg2: memref<8x128xf32, #tpu.memory_space<vmem>>, %arg3: memref<128x128xf32, #tpu.memory_space<vmem>>, %arg4: memref<1x128xf32, #tpu.memory_space<vmem>>, %arg5: memref<128x128xf32, #tpu.memory_space<vmem>>, %arg6: memref<1x128xf32, #tpu.memory_space<vmem>>, %arg7: memref<256x512xf32, #tpu.memory_space<vmem>>, %arg8: memref<1x512xf32, #tpu.memory_space<vmem>>, %arg9: memref<8x128xf32, #tpu.memory_space<vmem>>, %arg10: memref<8x128xf32, #tpu.memory_space<vmem>>) attributes {dimension_semantics = [], scalar_prefetch = 0 : i64, scratch_operands = 0 : i64, tpu.core_type = #tpu.core_type<tc>} {
    %c0 = arith.constant 0 : index
    %c0_0 = arith.constant 0 : index
    %0 = vector.load %arg0[%c0, %c0_0] : memref<8x128xf32, #tpu.memory_space<vmem>>, vector<8x128xf32>
    %c0_1 = arith.constant 0 : index
    %c0_2 = arith.constant 0 : index
    %1 = vector.load %arg1[%c0_1, %c0_2] : memref<8x128xf32, #tpu.memory_space<vmem>>, vector<8x128xf32>
    %c0_3 = arith.constant 0 : index
    %c0_4 = arith.constant 0 : index
    %2 = vector.load %arg2[%c0_3, %c0_4] : memref<8x128xf32, #tpu.memory_space<vmem>>, vector<8x128xf32>
    %c0_5 = arith.constant 0 : index
    %c0_6 = arith.constant 0 : index
    %3 = vector.load %arg3[%c0_5, %c0_6] : memref<128x128xf32, #tpu.memory_space<vmem>>, vector<128x128xf32>
    %c0_7 = arith.constant 0 : index
    %c0_8 = arith.constant 0 : index
    %4 = vector.load %arg4[%c0_7, %c0_8] : memref<1x128xf32, #tpu.memory_space<vmem>>, vector<1x128xf32>
    %c0_9 = arith.constant 0 : index
    %c0_10 = arith.constant 0 : index
    %5 = vector.load %arg5[%c0_9, %c0_10] : memref<128x128xf32, #tpu.memory_space<vmem>>, vector<128x128xf32>
    %c0_11 = arith.constant 0 : index
    %c0_12 = arith.constant 0 : index
    %6 = vector.load %arg6[%c0_11, %c0_12] : memref<1x128xf32, #tpu.memory_space<vmem>>, vector<1x128xf32>
    %cst = arith.constant dense<0.000000e+00> : vector<8x128xf32>
    %7 = tpu.matmul %1, %3, %cst {dimension_numbers = #tpu.dot_dimension_numbers<[1], [0], [0], [1], [0, 0, 1, 1], [], []>} : vector<8x128xf32>, vector<128x128xf32>, vector<8x128xf32> -> vector<8x128xf32>
    %8 = vector.broadcast %4 : vector<1x128xf32> to vector<8x128xf32>
    %9 = arith.addf %7, %8 : vector<8x128xf32>
    %10 = arith.negf %9 : vector<8x128xf32>
    %11 = math.exp %10 : vector<8x128xf32>
    %cst_13 = arith.constant 1.000000e+00 : f32
    %12 = vector.broadcast %cst_13 : f32 to vector<8x128xf32>
    %13 = arith.addf %12, %11 : vector<8x128xf32>
    %14 = arith.divf %12, %13 : vector<8x128xf32>
    %cst_14 = arith.constant 2.000000e+00 : f32
    %15 = vector.broadcast %cst_14 : f32 to vector<8x128xf32>
    %16 = arith.mulf %15, %14 : vector<8x128xf32>
    %17 = arith.mulf %16, %0 : vector<8x128xf32>
    %cst_15 = arith.constant dense<0.000000e+00> : vector<8x128xf32>
    %18 = tpu.matmul %17, %5, %cst_15 {dimension_numbers = #tpu.dot_dimension_numbers<[1], [0], [0], [1], [0, 0, 1, 1], [], []>} : vector<8x128xf32>, vector<128x128xf32>, vector<8x128xf32> -> vector<8x128xf32>
    %19 = vector.broadcast %6 : vector<1x128xf32> to vector<8x128xf32>
    %20 = arith.addf %18, %19 : vector<8x128xf32>
    %21 = arith.negf %20 : vector<8x128xf32>
    %22 = math.exp %21 : vector<8x128xf32>
    %cst_16 = arith.constant 1.000000e+00 : f32
    %23 = vector.broadcast %cst_16 : f32 to vector<8x128xf32>
    %24 = arith.addf %23, %22 : vector<8x128xf32>
    %25 = arith.divf %23, %24 : vector<8x128xf32>
    %cst_17 = arith.constant 2.000000e+00 : f32
    %26 = vector.broadcast %cst_17 : f32 to vector<8x128xf32>
    %27 = arith.mulf %26, %25 : vector<8x128xf32>
    %28 = arith.mulf %27, %1 : vector<8x128xf32>
    %cst_18 = arith.constant dense<0.000000e+00> : vector<8x128xf32>
    %29 = tpu.matmul %28, %3, %cst_18 {dimension_numbers = #tpu.dot_dimension_numbers<[1], [0], [0], [1], [0, 0, 1, 1], [], []>} : vector<8x128xf32>, vector<128x128xf32>, vector<8x128xf32> -> vector<8x128xf32>
    %30 = vector.broadcast %4 : vector<1x128xf32> to vector<8x128xf32>
    %31 = arith.addf %29, %30 : vector<8x128xf32>
    %32 = arith.negf %31 : vector<8x128xf32>
    %33 = math.exp %32 : vector<8x128xf32>
    %cst_19 = arith.constant 1.000000e+00 : f32
    %34 = vector.broadcast %cst_19 : f32 to vector<8x128xf32>
    %35 = arith.addf %34, %33 : vector<8x128xf32>
    %36 = arith.divf %34, %35 : vector<8x128xf32>
    %cst_20 = arith.constant 2.000000e+00 : f32
    %37 = vector.broadcast %cst_20 : f32 to vector<8x128xf32>
    %38 = arith.mulf %37, %36 : vector<8x128xf32>
    %39 = arith.mulf %38, %17 : vector<8x128xf32>
    %cst_21 = arith.constant dense<0.000000e+00> : vector<8x128xf32>
    %40 = tpu.matmul %39, %5, %cst_21 {dimension_numbers = #tpu.dot_dimension_numbers<[1], [0], [0], [1], [0, 0, 1, 1], [], []>} : vector<8x128xf32>, vector<128x128xf32>, vector<8x128xf32> -> vector<8x128xf32>
    %41 = vector.broadcast %6 : vector<1x128xf32> to vector<8x128xf32>
    %42 = arith.addf %40, %41 : vector<8x128xf32>
    %43 = arith.negf %42 : vector<8x128xf32>
    %44 = math.exp %43 : vector<8x128xf32>
    %cst_22 = arith.constant 1.000000e+00 : f32
    %45 = vector.broadcast %cst_22 : f32 to vector<8x128xf32>
    %46 = arith.addf %45, %44 : vector<8x128xf32>
    %47 = arith.divf %45, %46 : vector<8x128xf32>
    %cst_23 = arith.constant 2.000000e+00 : f32
    %48 = vector.broadcast %cst_23 : f32 to vector<8x128xf32>
    %49 = arith.mulf %48, %47 : vector<8x128xf32>
    %50 = arith.mulf %49, %28 : vector<8x128xf32>
    %cst_24 = arith.constant dense<0.000000e+00> : vector<8x128xf32>
    %51 = tpu.matmul %50, %3, %cst_24 {dimension_numbers = #tpu.dot_dimension_numbers<[1], [0], [0], [1], [0, 0, 1, 1], [], []>} : vector<8x128xf32>, vector<128x128xf32>, vector<8x128xf32> -> vector<8x128xf32>
    %52 = vector.broadcast %4 : vector<1x128xf32> to vector<8x128xf32>
    %53 = arith.addf %51, %52 : vector<8x128xf32>
    %54 = arith.negf %53 : vector<8x128xf32>
    %55 = math.exp %54 : vector<8x128xf32>
    %cst_25 = arith.constant 1.000000e+00 : f32
    %56 = vector.broadcast %cst_25 : f32 to vector<8x128xf32>
    %57 = arith.addf %56, %55 : vector<8x128xf32>
    %58 = arith.divf %56, %57 : vector<8x128xf32>
    %cst_26 = arith.constant 2.000000e+00 : f32
    %59 = vector.broadcast %cst_26 : f32 to vector<8x128xf32>
    %60 = arith.mulf %59, %58 : vector<8x128xf32>
    %61 = arith.mulf %60, %39 : vector<8x128xf32>
    %62 = tpu.concatenate %61, %50 in 1 : vector<8x128xf32>, vector<8x128xf32> -> vector<8x256xf32>
    %c0_27 = arith.constant 0 : index
    %c0_28 = arith.constant 0 : index
    %63 = vector.load %arg7[%c0_27, %c0_28] : memref<256x512xf32, #tpu.memory_space<vmem>>, vector<256x512xf32>
    %cst_29 = arith.constant dense<0.000000e+00> : vector<8x512xf32>
    %64 = tpu.matmul %62, %63, %cst_29 {dimension_numbers = #tpu.dot_dimension_numbers<[1], [0], [0], [1], [0, 0, 1, 1], [], []>} : vector<8x256xf32>, vector<256x512xf32>, vector<8x512xf32> -> vector<8x512xf32>
    %c0_30 = arith.constant 0 : index
    %c0_31 = arith.constant 0 : index
    %65 = vector.load %arg8[%c0_30, %c0_31] : memref<1x512xf32, #tpu.memory_space<vmem>>, vector<1x512xf32>
    %66 = vector.broadcast %65 : vector<1x512xf32> to vector<8x512xf32>
    %67 = arith.addf %64, %66 : vector<8x512xf32>
    %68 = arith.negf %67 : vector<8x512xf32>
    %69 = math.exp %68 : vector<8x512xf32>
    %cst_32 = arith.constant 1.000000e+00 : f32
    %70 = vector.broadcast %cst_32 : f32 to vector<8x512xf32>
    %71 = arith.addf %70, %69 : vector<8x512xf32>
    %72 = arith.divf %70, %71 : vector<8x512xf32>
    %73 = vector.extract_strided_slice %72 {offsets = [0, 0], sizes = [8, 128], strides = [1, 1]} : vector<8x512xf32> to vector<8x128xf32>
    %74 = vector.extract_strided_slice %72 {offsets = [0, 128], sizes = [8, 128], strides = [1, 1]} : vector<8x512xf32> to vector<8x128xf32>
    %75 = vector.extract_strided_slice %72 {offsets = [0, 384], sizes = [8, 128], strides = [1, 1]} : vector<8x512xf32> to vector<8x128xf32>
    %76 = vector.extract_strided_slice %67 {offsets = [0, 256], sizes = [8, 128], strides = [1, 1]} : vector<8x512xf32> to vector<8x128xf32>
    %77 = math.tanh %76 : vector<8x128xf32>
    %78 = arith.mulf %74, %2 : vector<8x128xf32>
    %79 = arith.mulf %73, %77 : vector<8x128xf32>
    %80 = arith.addf %78, %79 : vector<8x128xf32>
    %81 = math.tanh %80 : vector<8x128xf32>
    %82 = arith.mulf %75, %81 : vector<8x128xf32>
    %c0_33 = arith.constant 0 : index
    %c0_34 = arith.constant 0 : index
    %83 = vector.load %arg9[%c0_33, %c0_34] : memref<8x128xf32, #tpu.memory_space<vmem>>, vector<8x128xf32>
    tpu.vector_store %arg9[%c0_33, %c0_34], %82 {strides = array<i32>} : memref<8x128xf32, #tpu.memory_space<vmem>>, vector<8x128xf32>,
    %c0_35 = arith.constant 0 : index
    %c0_36 = arith.constant 0 : index
    %84 = vector.load %arg10[%c0_35, %c0_36] : memref<8x128xf32, #tpu.memory_space<vmem>>, vector<8x128xf32>
    tpu.vector_store %arg10[%c0_35, %c0_36], %80 {strides = array<i32>} : memref<8x128xf32, #tpu.memory_space<vmem>>, vector<8x128xf32>,
    return
  }
}

</mosaic_0001>

<llo_original>
// kernel: tpu_custom_call.1
$region0: #{tpu_custom_call.1}
  #allocation0 [shape = 'u32[]', space=smem, size = 0x4, offset = 0x4, fixed_abs, tag = 'smem constant byte address 0x4 - core index']
  #allocation1 [shape = 'u32[72,128]{1,0:T(1,128)}', space=vmem, size = 0x9000, scoped, tag = 'internal scratch']
  %s0 = inlined_call_operand.vmem [shape: f32[8,128], index: 0, kind: input, shape index: {}]
  %s1 = inlined_call_operand.hbm [shape: f32[8,128], index: 1, kind: input, shape index: {}, may-alias: {1,9}]
  %s2 = inlined_call_operand.hbm [shape: f32[8,128], index: 2, kind: input, shape index: {}, may-alias: {2,10}]
  %s3 = inlined_call_operand.hbm [shape: f32[128,128], index: 3, kind: input, shape index: {}]
  %s4 = inlined_call_operand.vmem [shape: f32[1,128], index: 4, kind: input, shape index: {}]
  %s5 = inlined_call_operand.hbm [shape: f32[128,128], index: 5, kind: input, shape index: {}]
  %s6 = inlined_call_operand.vmem [shape: f32[1,128], index: 6, kind: input, shape index: {}]
  %s7 = inlined_call_operand.hbm [shape: f32[256,512], index: 7, kind: input, shape index: {}]
  %s8 = inlined_call_operand.vmem [shape: f32[1,512], index: 8, kind: input, shape index: {}]
  %s9 = inlined_call_operand.hbm [shape: f32[8,128], index: 9, kind: output, shape index: {0}, may-alias: {1,9}]
  %s10 = inlined_call_operand.hbm [shape: f32[8,128], index: 10, kind: output, shape index: {1}, may-alias: {2,10}]
  %11 = xla_tuple %s9, %s10
  %s12 = sld [smem:[#allocation0]]
  $region74: #{tpu_custom_call.1} parent=0
    _
  %s14 = ssub.s32 1, %s12
  %s15 = scalar_select 0, %s14, %s12
  $region1: #{tpu_custom_call.1} parent=0
    #allocation2 [shape = 'u8[4096]{0}', space=vmem, size = 0x1000, scoped, tag = 'input window, operand 1, single buffered']
    #allocation3 [shape = 's32[1]{0}', space=sflag, size = 0x4, scoped, tag = 'scoped memory for tpu_custom_call.1']
    #allocation4 [shape = 's32[1]{0}', space=sflag, size = 0x4, scoped, tag = 'scoped memory for tpu_custom_call.1']
    #allocation5 [shape = 'u8[4096]{0}', space=vmem, size = 0x1000, scoped, tag = 'input window, operand 2, single buffered']
    #allocation6 [shape = 's32[1]{0}', space=sflag, size = 0x4, scoped, tag = 'scoped memory for tpu_custom_call.1']
    #allocation7 [shape = 'u8[65536]{0}', space=vmem, size = 0x10000, scoped, tag = 'input window, operand 3, single buffered']
    #allocation8 [shape = 'u8[65536]{0}', space=vmem, size = 0x10000, scoped, tag = 'input window, operand 5, single buffered']
    #allocation9 [shape = 's32[1]{0}', space=sflag, size = 0x4, scoped, tag = 'scoped memory for tpu_custom_call.1']
    #allocation10 [shape = 'u8[524288]{0}', space=vmem, size = 0x80000, scoped, tag = 'input window, operand 7, single buffered']
    #allocation11 [shape = 'u8[4096]{0}', space=vmem, size = 0x1000, scoped, tag = 'output window, operand 0, single buffered']
    #allocation12 [shape = 'u8[4096]{0}', space=vmem, size = 0x1000, scoped, tag = 'output window, operand 1, single buffered']
    #allocation13 [shape = 's32[1]{0}', space=sflag, size = 0x4, scoped, tag = 'scoped memory for tpu_custom_call.1']
    %16 = vsyncpa [#allocation3], 0
    %17 = vsyncpa [#allocation6], 0
    %18 = vsyncpa [#allocation9], 0
    %19 = vsyncpa [#allocation4], 0
    %20 = vsyncpa [#allocation13], 0
    // Predicated region
    $region2: #{tpu_custom_call.1} parent=1 // pred_check
      _
    $region3: #{tpu_custom_call.1} parent=1 // pred_check_branch
      %22 = sbr.rel (0) target = $region5
    $region4: #{tpu_custom_call.1} parent=1 // pred_region
      _
    $region5: #{tpu_custom_call.1} parent=1 // pred_fallthru
      _
    // Predicated region
    $region6: #{tpu_custom_call.1} parent=1 // pred_check
      _
    $region7: #{tpu_custom_call.1} parent=1 // pred_check_branch
      %24 = sbr.rel (0) target = $region9
    $region8: #{tpu_custom_call.1} parent=1 // pred_region
      %26 = vsyncadd [#allocation3], 0
      %s28 = sshll.u32 %s1, 4
      %s29 = int_to_ptr.hbm [resolvable:$true] %s28
      %s30 = sshll.u32 [#allocation2], 4
      %s31 = int_to_ptr.vmem [resolvable:$true] %s30
      %33 = dma.hbm_to_vmem [thread:$0]  %s29, 128, %s31, [#allocation3]
    $region9: #{tpu_custom_call.1} parent=1 // pred_fallthru
      _
    // Predicated region
    $region10: #{tpu_custom_call.1} parent=1 // pred_check
      _
    $region11: #{tpu_custom_call.1} parent=1 // pred_check_branch
      %35 = sbr.rel (0) target = $region13
    $region12: #{tpu_custom_call.1} parent=1 // pred_region
      %37 = vsyncadd [#allocation6], 0
      %s39 = sshll.u32 %s2, 4
      %s40 = int_to_ptr.hbm [resolvable:$true] %s39
      %s41 = sshll.u32 [#allocation5], 4
      %s42 = int_to_ptr.vmem [resolvable:$true] %s41
      %44 = dma.hbm_to_vmem [thread:$0]  %s40, 128, %s42, [#allocation6]
    $region13: #{tpu_custom_call.1} parent=1 // pred_fallthru
      _
    // Predicated region
    $region14: #{tpu_custom_call.1} parent=1 // pred_check
      _
    $region15: #{tpu_custom_call.1} parent=1 // pred_check_branch
      %46 = sbr.rel (0) target = $region17
    $region16: #{tpu_custom_call.1} parent=1 // pred_region
      %48 = vsyncadd [#allocation6], 0
      %s49 = sshll.u32 %s3, 4
      %s50 = int_to_ptr.hbm [resolvable:$true] %s49
      %s51 = sshll.u32 [#allocation7], 4
      %s52 = int_to_ptr.vmem [resolvable:$true] %s51
      %57 = dma.hbm_to_vmem [thread:$0]  %s50, 2048, %s52, [#allocation6], 128, 128, 8
    $region17: #{tpu_custom_call.1} parent=1 // pred_fallthru
      _
    // Predicated region
    $region18: #{tpu_custom_call.1} parent=1 // pred_check
      _
    $region19: #{tpu_custom_call.1} parent=1 // pred_check_branch
      %59 = sbr.rel (0) target = $region21
    $region20: #{tpu_custom_call.1} parent=1 // pred_region
      _
    $region21: #{tpu_custom_call.1} parent=1 // pred_fallthru
      _
    // Predicated region
    $region22: #{tpu_custom_call.1} parent=1 // pred_check
      _
    $region23: #{tpu_custom_call.1} parent=1 // pred_check_branch
      %61 = sbr.rel (0) target = $region25
    $region24: #{tpu_custom_call.1} parent=1 // pred_region
      %63 = vsyncadd [#allocation9], 0
      %s64 = sshll.u32 %s5, 4
      %s65 = int_to_ptr.hbm [resolvable:$true] %s64
      %s66 = sshll.u32 [#allocation8], 4
      %s67 = int_to_ptr.vmem [resolvable:$true] %s66
      %72 = dma.hbm_to_vmem [thread:$0]  %s65, 2048, %s67, [#allocation9], 128, 128, 8
    $region25: #{tpu_custom_call.1} parent=1 // pred_fallthru
      _
    // Predicated region
    $region26: #{tpu_custom_call.1} parent=1 // pred_check
      _
    $region27: #{tpu_custom_call.1} parent=1 // pred_check_branch
      %74 = sbr.rel (0) target = $region29
    $region28: #{tpu_custom_call.1} parent=1 // pred_region
      _
    $region29: #{tpu_custom_call.1} parent=1 // pred_fallthru
      _
    // Predicated region
    $region30: #{tpu_custom_call.1} parent=1 // pred_check
      _
    $region31: #{tpu_custom_call.1} parent=1 // pred_check_branch
      %76 = sbr.rel (0) target = $region33
    $region32: #{tpu_custom_call.1} parent=1 // pred_region
      %78 = vsyncadd [#allocation9], 0
      %s79 = sshll.u32 %s7, 4
      %s80 = int_to_ptr.hbm [resolvable:$true] %s79
      %s81 = sshll.u32 [#allocation10], 4
      %s82 = int_to_ptr.vmem [resolvable:$true] %s81
      %87 = dma.hbm_to_vmem [thread:$0]  %s80, 16384, %s82, [#allocation9], 512, 512, 32
    $region33: #{tpu_custom_call.1} parent=1 // pred_fallthru
      _
    // Predicated region
    $region34: #{tpu_custom_call.1} parent=1 // pred_check
      _
    $region35: #{tpu_custom_call.1} parent=1 // pred_check_branch
      %89 = sbr.rel (0) target = $region37
    $region36: #{tpu_custom_call.1} parent=1 // pred_region
      _
    $region37: #{tpu_custom_call.1} parent=1 // pred_fallthru
      _
    // Predicated region
    $region38: #{tpu_custom_call.1} parent=1 // pred_check
      _
    $region39: #{tpu_custom_call.1} parent=1 // pred_check_branch
      %91 = sbr.rel (0) target = $region41
    $region40: #{tpu_custom_call.1} parent=1 // pred_region
      %93 = dma.done [#allocation3], 128
    $region41: #{tpu_custom_call.1} parent=1 // pred_fallthru
      _
    // Predicated region
    $region42: #{tpu_custom_call.1} parent=1 // pred_check
      _
    $region43: #{tpu_custom_call.1} parent=1 // pred_check_branch
      %95 = sbr.rel (0) target = $region45
    $region44: #{tpu_custom_call.1} parent=1 // pred_region
      %97 = dma.done [#allocation6], 128
    $region45: #{tpu_custom_call.1} parent=1 // pred_fallthru
      _
    // Predicated region
    $region46: #{tpu_custom_call.1} parent=1 // pred_check
      _
    $region47: #{tpu_custom_call.1} parent=1 // pred_check_branch
      %99 = sbr.rel (0) target = $region49
    $region48: #{tpu_custom_call.1} parent=1 // pred_region
      %101 = dma.done [#allocation6], 2048
    $region49: #{tpu_custom_call.1} parent=1 // pred_fallthru
      _
    // Predicated region
    $region50: #{tpu_custom_call.1} parent=1 // pred_check
      _
    $region51: #{tpu_custom_call.1} parent=1 // pred_check_branch
      %103 = sbr.rel (0) target = $region53
    $region52: #{tpu_custom_call.1} parent=1 // pred_region
      %105 = dma.done [#allocation9], 2048
    $region53: #{tpu_custom_call.1} parent=1 // pred_fallthru
      _
    // Predicated region
    $region54: #{tpu_custom_call.1} parent=1 // pred_check
      _
    $region55: #{tpu_custom_call.1} parent=1 // pred_check_branch
      %107 = sbr.rel (0) target = $region57
    $region56: #{tpu_custom_call.1} parent=1 // pred_region
      %109 = dma.done [#allocation9], 16384
    $region57: #{tpu_custom_call.1} parent=1 // pred_fallthru
      _
    %v110 = vld [vmem:[%s0] sm:$0xff]
    %v111 = vld [vmem:[#allocation2] sm:$0xff]
    %v112 = vld [vmem:[#allocation5] sm:$0xff]
    %v113 = vld [vmem:[#allocation7] sm:$0xff]
    %v114 = vld [vmem:[#allocation7 + $0x8] sm:$0xff]
    %v115 = vld [vmem:[#allocation7 + $0x10] sm:$0xff]
    %v116 = vld [vmem:[#allocation7 + $0x18] sm:$0xff]
    %v117 = vld [vmem:[#allocation7 + $0x20] sm:$0xff]
    %v118 = vld [vmem:[#allocation7 + $0x28] sm:$0xff]
    %v119 = vld [vmem:[#allocation7 + $0x30] sm:$0xff]
    %v120 = vld [vmem:[#allocation7 + $0x38] sm:$0xff]
    %v121 = vld [vmem:[#allocation7 + $0x40] sm:$0xff]
    %v122 = vld [vmem:[#allocation7 + $0x48] sm:$0xff]
    %v123 = vld [vmem:[#allocation7 + $0x50] sm:$0xff]
    %v124 = vld [vmem:[#allocation7 + $0x58] sm:$0xff]
    %v125 = vld [vmem:[#allocation7 + $0x60] sm:$0xff]
    %v126 = vld [vmem:[#allocation7 + $0x68] sm:$0xff]
    %v127 = vld [vmem:[#allocation7 + $0x70] sm:$0xff]
    %v128 = vld [vmem:[#allocation7 + $0x78] sm:$0xff]
    %v129 = vld [vmem:[%s4] sm:$0x1]
    %v130 = vld [vmem:[#allocation8] sm:$0xff]
    %v131 = vld [vmem:[#allocation8 + $0x8] sm:$0xff]
    %v132 = vld [vmem:[#allocation8 + $0x10] sm:$0xff]
    %v133 = vld [vmem:[#allocation8 + $0x18] sm:$0xff]
    %v134 = vld [vmem:[#allocation8 + $0x20] sm:$0xff]
    %v135 = vld [vmem:[#allocation8 + $0x28] sm:$0xff]
    %v136 = vld [vmem:[#allocation8 + $0x30] sm:$0xff]
    %v137 = vld [vmem:[#allocation8 + $0x38] sm:$0xff]
    %v138 = vld [vmem:[#allocation8 + $0x40] sm:$0xff]
    %v139 = vld [vmem:[#allocation8 + $0x48] sm:$0xff]
    %v140 = vld [vmem:[#allocation8 + $0x50] sm:$0xff]
    %v141 = vld [vmem:[#allocation8 + $0x58] sm:$0xff]
    %v142 = vld [vmem:[#allocation8 + $0x60] sm:$0xff]
    %v143 = vld [vmem:[#allocation8 + $0x68] sm:$0xff]
    %v144 = vld [vmem:[#allocation8 + $0x70] sm:$0xff]
    %v145 = vld [vmem:[#allocation8 + $0x78] sm:$0xff]
    %v146 = vld [vmem:[%s6] sm:$0x1]
    %v148 = vperm.slane %v129, 0
    %150 = vmatpush.msra.mxu0 %v128
    %151 = vmatpush.msra.mxu0 %v127
    %152 = vmatpush.msra.mxu0 %v126
    %153 = vmatpush.msra.mxu0 %v125
    %154 = vmatpush.msra.mxu0 %v124
    %155 = vmatpush.msra.mxu0 %v123
    %156 = vmatpush.msra.mxu0 %v122
    %157 = vmatpush.msra.mxu0 %v121
    %158 = vmatpush.msra.mxu0 %v120
    %159 = vmatpush.msra.mxu0 %v119
    %160 = vmatpush.msra.mxu0 %v118
    %161 = vmatpush.msra.mxu0 %v117
    %162 = vmatpush.msra.mxu0 %v116
    %163 = vmatpush.msra.mxu0 %v115
    %164 = vmatpush.msra.mxu0 %v114
    %165 = vmatpush.msra.mxu0 %v113
    %166 = vmatmul.f32.gmra.mxu0 %v111
    %v167 = vpop.f32.mrf.mxu0
    %v168 = vadd.f32 %v148, %v167
    %169 = vdwg.mxu0
    %v170 = vxor.u32 %v168, 2147483648
    %v171 = vmul.f32 %v170, 1.442695
    %v172 = vpow.pop %v171
    %v173 = vadd.f32 %v172, 1.0
    %v174 = vrcp.pop %v173
    %v175 = vmul.f32 %v173, %v174
    %v176 = vsub.f32 1.0, %v175
    %v177 = vmul.f32 %v174, %v176
    %v178 = vadd.f32 %v174, %v177
    %vm179 = vweird.f32 %v173
    %vm180 = vweird.f32 %v174
    %vm181 = vmor %vm179, %vm180
    %v182 = vsel %vm181, %v174, %v178
    %v183 = vand.u32 2147483647, %v173
    %vm184 = vcmp.eq.f32.partialorder %v183, 8.507059e+37
    %v185 = vand.u32 %v173, 2147483648
    %v186 = vor.u32 1.1754944e-38, %v185
    %v187 = vsel %vm184, %v186, %v182
    %v188 = vmul.f32 1.0, %v187
    %v189 = vmul.f32 %v188, 2.0
    %v190 = vmul.f32 %v189, %v110
    %v192 = vperm.slane %v146, 0
    %194 = vmatpush.msra.mxu0 %v145
    %195 = vmatpush.msra.mxu0 %v144
    %196 = vmatpush.msra.mxu0 %v143
    %197 = vmatpush.msra.mxu0 %v142
    %198 = vmatpush.msra.mxu0 %v141
    %199 = vmatpush.msra.mxu0 %v140
    %200 = vmatpush.msra.mxu0 %v139
    %201 = vmatpush.msra.mxu0 %v138
    %202 = vmatpush.msra.mxu0 %v137
    %203 = vmatpush.msra.mxu0 %v136
    %204 = vmatpush.msra.mxu0 %v135
    %205 = vmatpush.msra.mxu0 %v134
    %206 = vmatpush.msra.mxu0 %v133
    %207 = vmatpush.msra.mxu0 %v132
    %208 = vmatpush.msra.mxu0 %v131
    %209 = vmatpush.msra.mxu0 %v130
    %210 = vmatmul.f32.gmra.mxu0 %v190
    %v211 = vpop.f32.mrf.mxu0
    %v212 = vadd.f32 %v192, %v211
    %213 = vdwg.mxu0
    %v214 = vxor.u32 %v212, 2147483648
    %v215 = vmul.f32 %v214, 1.442695
    %v216 = vpow.pop %v215
    %v217 = vadd.f32 %v216, 1.0
    %v218 = vrcp.pop %v217
    %v219 = vmul.f32 %v217, %v218
    %v220 = vsub.f32 1.0, %v219
    %v221 = vmul.f32 %v218, %v220
    %v222 = vadd.f32 %v218, %v221
    %vm223 = vweird.f32 %v217
    %vm224 = vweird.f32 %v218
    %vm225 = vmor %vm223, %vm224
    %v226 = vsel %vm225, %v218, %v222
    %v227 = vand.u32 2147483647, %v217
    %vm228 = vcmp.eq.f32.partialorder %v227, 8.507059e+37
    %v229 = vand.u32 %v217, 2147483648
    %v230 = vor.u32 1.1754944e-38, %v229
    %v231 = vsel %vm228, %v230, %v226
    %v232 = vmul.f32 1.0, %v231
    %v233 = vmul.f32 %v232, 2.0
    %v234 = vmul.f32 %v233, %v111
    %235 = vmatpush.msra.mxu0 %v128
    %236 = vmatpush.msra.mxu0 %v127
    %237 = vmatpush.msra.mxu0 %v126
    %238 = vmatpush.msra.mxu0 %v125
    %239 = vmatpush.msra.mxu0 %v124
    %240 = vmatpush.msra.mxu0 %v123
    %241 = vmatpush.msra.mxu0 %v122
    %242 = vmatpush.msra.mxu0 %v121
    %243 = vmatpush.msra.mxu0 %v120
    %244 = vmatpush.msra.mxu0 %v119
    %245 = vmatpush.msra.mxu0 %v118
    %246 = vmatpush.msra.mxu0 %v117
    %247 = vmatpush.msra.mxu0 %v116
    %248 = vmatpush.msra.mxu0 %v115
    %249 = vmatpush.msra.mxu0 %v114
    %250 = vmatpush.msra.mxu0 %v113
    %251 = vmatmul.f32.gmra.mxu0 %v234
    %v252 = vpop.f32.mrf.mxu0
    %v253 = vadd.f32 %v148, %v252
    %254 = vdwg.mxu0
    %v255 = vxor.u32 %v253, 2147483648
    %v256 = vmul.f32 %v255, 1.442695
    %v257 = vpow.pop %v256
    %v258 = vadd.f32 %v257, 1.0
    %v259 = vrcp.pop %v258
    %v260 = vmul.f32 %v258, %v259
    %v261 = vsub.f32 1.0, %v260
    %v262 = vmul.f32 %v259, %v261
    %v263 = vadd.f32 %v259, %v262
    %vm264 = vweird.f32 %v258
    %vm265 = vweird.f32 %v259
    %vm266 = vmor %vm264, %vm265
    %v267 = vsel %vm266, %v259, %v263
    %v268 = vand.u32 2147483647, %v258
    %vm269 = vcmp.eq.f32.partialorder %v268, 8.507059e+37
    %v270 = vand.u32 %v258, 2147483648
    %v271 = vor.u32 1.1754944e-38, %v270
    %v272 = vsel %vm269, %v271, %v267
    %v273 = vmul.f32 1.0, %v272
    %v274 = vmul.f32 %v273, 2.0
    %v275 = vmul.f32 %v274, %v190
    %276 = vmatpush.msra.mxu0 %v145
    %277 = vmatpush.msra.mxu0 %v144
    %278 = vmatpush.msra.mxu0 %v143
    %279 = vmatpush.msra.mxu0 %v142
    %280 = vmatpush.msra.mxu0 %v141
    %281 = vmatpush.msra.mxu0 %v140
    %282 = vmatpush.msra.mxu0 %v139
    %283 = vmatpush.msra.mxu0 %v138
    %284 = vmatpush.msra.mxu0 %v137
    %285 = vmatpush.msra.mxu0 %v136
    %286 = vmatpush.msra.mxu0 %v135
    %287 = vmatpush.msra.mxu0 %v134
    %288 = vmatpush.msra.mxu0 %v133
    %289 = vmatpush.msra.mxu0 %v132
    %290 = vmatpush.msra.mxu0 %v131
    %291 = vmatpush.msra.mxu0 %v130
    %292 = vmatmul.f32.gmra.mxu0 %v275
    %v293 = vpop.f32.mrf.mxu0
    %v294 = vadd.f32 %v192, %v293
    %295 = vdwg.mxu0
    %v296 = vxor.u32 %v294, 2147483648
    %v297 = vmul.f32 %v296, 1.442695
    %v298 = vpow.pop %v297
    %v299 = vadd.f32 %v298, 1.0
    %v300 = vrcp.pop %v299
    %v301 = vmul.f32 %v299, %v300
    %v302 = vsub.f32 1.0, %v301
    %v303 = vmul.f32 %v300, %v302
    %v304 = vadd.f32 %v300, %v303
    %vm305 = vweird.f32 %v299
    %vm306 = vweird.f32 %v300
    %vm307 = vmor %vm305, %vm306
    %v308 = vsel %vm307, %v300, %v304
    %v309 = vand.u32 2147483647, %v299
    %vm310 = vcmp.eq.f32.partialorder %v309, 8.507059e+37
    %v311 = vand.u32 %v299, 2147483648
    %v312 = vor.u32 1.1754944e-38, %v311
    %v313 = vsel %vm310, %v312, %v308
    %v314 = vmul.f32 1.0, %v313
    %v315 = vmul.f32 %v314, 2.0
    %v316 = vmul.f32 %v315, %v234
    %317 = vmatpush.msra.mxu0 %v128
    %318 = vmatpush.msra.mxu0 %v127
    %319 = vmatpush.msra.mxu0 %v126
    %320 = vmatpush.msra.mxu0 %v125
    %321 = vmatpush.msra.mxu0 %v124
    %322 = vmatpush.msra.mxu0 %v123
    %323 = vmatpush.msra.mxu0 %v122
    %324 = vmatpush.msra.mxu0 %v121
    %325 = vmatpush.msra.mxu0 %v120
    %326 = vmatpush.msra.mxu0 %v119
    %327 = vmatpush.msra.mxu0 %v118
    %328 = vmatpush.msra.mxu0 %v117
    %329 = vmatpush.msra.mxu0 %v116
    %330 = vmatpush.msra.mxu0 %v115
    %331 = vmatpush.msra.mxu0 %v114
    %332 = vmatpush.msra.mxu0 %v113
    %333 = vmatmul.f32.gmra.mxu0 %v316
    %v334 = vpop.f32.mrf.mxu0
    %v335 = vadd.f32 %v148, %v334
    %336 = vdwg.mxu0
    %v337 = vxor.u32 %v335, 2147483648
    %v338 = vmul.f32 %v337, 1.442695
    %v339 = vpow.pop %v338
    %v340 = vadd.f32 %v339, 1.0
    %v341 = vrcp.pop %v340
    %v342 = vmul.f32 %v340, %v341
    %v343 = vsub.f32 1.0, %v342
    %v344 = vmul.f32 %v341, %v343
    %v345 = vadd.f32 %v341, %v344
    %vm346 = vweird.f32 %v340
    %vm347 = vweird.f32 %v341
    %vm348 = vmor %vm346, %vm347
    %v349 = vsel %vm348, %v341, %v345
    %v350 = vand.u32 2147483647, %v340
    %vm351 = vcmp.eq.f32.partialorder %v350, 8.507059e+37
    %v352 = vand.u32 %v340, 2147483648
    %v353 = vor.u32 1.1754944e-38, %v352
    %v354 = vsel %vm351, %v353, %v349
    %v355 = vmul.f32 1.0, %v354
    %v356 = vmul.f32 %v355, 2.0
    %v357 = vmul.f32 %v356, %v275
    %v358 = vld [vmem:[#allocation10] sm:$0xff]
    %v359 = vld [vmem:[#allocation10 + $0x8] sm:$0xff]
    %v360 = vld [vmem:[#allocation10 + $0x10] sm:$0xff]
    %v361 = vld [vmem:[#allocation10 + $0x18] sm:$0xff]
    %v362 = vld [vmem:[#allocation10 + $0x20] sm:$0xff]
    %v363 = vld [vmem:[#allocation10 + $0x28] sm:$0xff]
    %v364 = vld [vmem:[#allocation10 + $0x30] sm:$0xff]
    %v365 = vld [vmem:[#allocation10 + $0x38] sm:$0xff]
    %v366 = vld [vmem:[#allocation10 + $0x40] sm:$0xff]
    %v367 = vld [vmem:[#allocation10 + $0x48] sm:$0xff]
    %v368 = vld [vmem:[#allocation10 + $0x50] sm:$0xff]
    %v369 = vld [vmem:[#allocation10 + $0x58] sm:$0xff]
    %v370 = vld [vmem:[#allocation10 + $0x60] sm:$0xff]
    %v371 = vld [vmem:[#allocation10 + $0x68] sm:$0xff]
    %v372 = vld [vmem:[#allocation10 + $0x70] sm:$0xff]
    %v373 = vld [vmem:[#allocation10 + $0x78] sm:$0xff]
    %v374 = vld [vmem:[#allocation10 + $0x80] sm:$0xff]
    %v375 = vld [vmem:[#allocation10 + $0x88] sm:$0xff]
    %v376 = vld [vmem:[#allocation10 + $0x90] sm:$0xff]
    %v377 = vld [vmem:[#allocation10 + $0x98] sm:$0xff]
    %v378 = vld [vmem:[#allocation10 + $0xa0] sm:$0xff]
    %v379 = vld [vmem:[#allocation10 + $0xa8] sm:$0xff]
    %v380 = vld [vmem:[#allocation10 + $0xb0] sm:$0xff]
    %v381 = vld [vmem:[#allocation10 + $0xb8] sm:$0xff]
    %v382 = vld [vmem:[#allocation10 + $0xc0] sm:$0xff]
    %v383 = vld [vmem:[#allocation10 + $0xc8] sm:$0xff]
    %v384 = vld [vmem:[#allocation10 + $0xd0] sm:$0xff]
    %v385 = vld [vmem:[#allocation10 + $0xd8] sm:$0xff]
    %v386 = vld [vmem:[#allocation10 + $0xe0] sm:$0xff]
    %v387 = vld [vmem:[#allocation10 + $0xe8] sm:$0xff]
    %v388 = vld [vmem:[#allocation10 + $0xf0] sm:$0xff]
    %v389 = vld [vmem:[#allocation10 + $0xf8] sm:$0xff]
    %v390 = vld [vmem:[#allocation10 + $0x100] sm:$0xff]
    %v391 = vld [vmem:[#allocation10 + $0x108] sm:$0xff]
    %v392 = vld [vmem:[#allocation10 + $0x110] sm:$0xff]
    %v393 = vld [vmem:[#allocation10 + $0x118] sm:$0xff]
    %v394 = vld [vmem:[#allocation10 + $0x120] sm:$0xff]
    %v395 = vld [vmem:[#allocation10 + $0x128] sm:$0xff]
    %v396 = vld [vmem:[#allocation10 + $0x130] sm:$0xff]
    %v397 = vld [vmem:[#allocation10 + $0x138] sm:$0xff]
    %v398 = vld [vmem:[#allocation10 + $0x140] sm:$0xff]
    %v399 = vld [vmem:[#allocation10 + $0x148] sm:$0xff]
    %v400 = vld [vmem:[#allocation10 + $0x150] sm:$0xff]
    %v401 = vld [vmem:[#allocation10 + $0x158] sm:$0xff]
    %v402 = vld [vmem:[#allocation10 + $0x160] sm:$0xff]
    %v403 = vld [vmem:[#allocation10 + $0x168] sm:$0xff]
    %v404 = vld [vmem:[#allocation10 + $0x170] sm:$0xff]
    %v405 = vld [vmem:[#allocation10 + $0x178] sm:$0xff]
    %v406 = vld [vmem:[#allocation10 + $0x180] sm:$0xff]
    %v407 = vld [vmem:[#allocation10 + $0x188] sm:$0xff]
    %v408 = vld [vmem:[#allocation10 + $0x190] sm:$0xff]
    %v409 = vld [vmem:[#allocation10 + $0x198] sm:$0xff]
    %v410 = vld [vmem:[#allocation10 + $0x1a0] sm:$0xff]
    %v411 = vld [vmem:[#allocation10 + $0x1a8] sm:$0xff]
    %v412 = vld [vmem:[#allocation10 + $0x1b0] sm:$0xff]
    %v413 = vld [vmem:[#allocation10 + $0x1b8] sm:$0xff]
    %v414 = vld [vmem:[#allocation10 + $0x1c0] sm:$0xff]
    %v415 = vld [vmem:[#allocation10 + $0x1c8] sm:$0xff]
    %v416 = vld [vmem:[#allocation10 + $0x1d0] sm:$0xff]
    %v417 = vld [vmem:[#allocation10 + $0x1d8] sm:$0xff]
    %v418 = vld [vmem:[#allocation10 + $0x1e0] sm:$0xff]
    %v419 = vld [vmem:[#allocation10 + $0x1e8] sm:$0xff]
    %v420 = vld [vmem:[#allocation10 + $0x1f0] sm:$0xff]
    %v421 = vld [vmem:[#allocation10 + $0x1f8] sm:$0xff]
    %v422 = vld [vmem:[#allocation10 + $0x200] sm:$0xff]
    %v423 = vld [vmem:[#allocation10 + $0x208] sm:$0xff]
    %v424 = vld [vmem:[#allocation10 + $0x210] sm:$0xff]
    %v425 = vld [vmem:[#allocation10 + $0x218] sm:$0xff]
    %v426 = vld [vmem:[#allocation10 + $0x220] sm:$0xff]
    %v427 = vld [vmem:[#allocation10 + $0x228] sm:$0xff]
    %v428 = vld [vmem:[#allocation10 + $0x230] sm:$0xff]
    %v429 = vld [vmem:[#allocation10 + $0x238] sm:$0xff]
    %v430 = vld [vmem:[#allocation10 + $0x240] sm:$0xff]
    %v431 = vld [vmem:[#allocation10 + $0x248] sm:$0xff]
    %v432 = vld [vmem:[#allocation10 + $0x250] sm:$0xff]
    %v433 = vld [vmem:[#allocation10 + $0x258] sm:$0xff]
    %v434 = vld [vmem:[#allocation10 + $0x260] sm:$0xff]
    %v435 = vld [vmem:[#allocation10 + $0x268] sm:$0xff]
    %v436 = vld [vmem:[#allocation10 + $0x270] sm:$0xff]
    %v437 = vld [vmem:[#allocation10 + $0x278] sm:$0xff]
    %v438 = vld [vmem:[#allocation10 + $0x280] sm:$0xff]
    %v439 = vld [vmem:[#allocation10 + $0x288] sm:$0xff]
    %v440 = vld [vmem:[#allocation10 + $0x290] sm:$0xff]
    %v441 = vld [vmem:[#allocation10 + $0x298] sm:$0xff]
    %v442 = vld [vmem:[#allocation10 + $0x2a0] sm:$0xff]
    %v443 = vld [vmem:[#allocation10 + $0x2a8] sm:$0xff]
    %v444 = vld [vmem:[#allocation10 + $0x2b0] sm:$0xff]
    %v445 = vld [vmem:[#allocation10 + $0x2b8] sm:$0xff]
    %v446 = vld [vmem:[#allocation10 + $0x2c0] sm:$0xff]
    %v447 = vld [vmem:[#allocation10 + $0x2c8] sm:$0xff]
    %v448 = vld [vmem:[#allocation10 + $0x2d0] sm:$0xff]
    %v449 = vld [vmem:[#allocation10 + $0x2d8] sm:$0xff]
    %v450 = vld [vmem:[#allocation10 + $0x2e0] sm:$0xff]
    %v451 = vld [vmem:[#allocation10 + $0x2e8] sm:$0xff]
    %v452 = vld [vmem:[#allocation10 + $0x2f0] sm:$0xff]
    %v453 = vld [vmem:[#allocation10 + $0x2f8] sm:$0xff]
    %v454 = vld [vmem:[#allocation10 + $0x300] sm:$0xff]
    %v455 = vld [vmem:[#allocation10 + $0x308] sm:$0xff]
    %v456 = vld [vmem:[#allocation10 + $0x310] sm:$0xff]
    %v457 = vld [vmem:[#allocation10 + $0x318] sm:$0xff]
    %v458 = vld [vmem:[#allocation10 + $0x320] sm:$0xff]
    %v459 = vld [vmem:[#allocation10 + $0x328] sm:$0xff]
    %v460 = vld [vmem:[#allocation10 + $0x330] sm:$0xff]
    %v461 = vld [vmem:[#allocation10 + $0x338] sm:$0xff]
    %v462 = vld [vmem:[#allocation10 + $0x340] sm:$0xff]
    %v463 = vld [vmem:[#allocation10 + $0x348] sm:$0xff]
    %v464 = vld [vmem:[#allocation10 + $0x350] sm:$0xff]
    %v465 = vld [vmem:[#allocation10 + $0x358] sm:$0xff]
    %v466 = vld [vmem:[#allocation10 + $0x360] sm:$0xff]
    %v467 = vld [vmem:[#allocation10 + $0x368] sm:$0xff]
    %v468 = vld [vmem:[#allocation10 + $0x370] sm:$0xff]
    %v469 = vld [vmem:[#allocation10 + $0x378] sm:$0xff]
    %v470 = vld [vmem:[#allocation10 + $0x380] sm:$0xff]
    %v471 = vld [vmem:[#allocation10 + $0x388] sm:$0xff]
    %v472 = vld [vmem:[#allocation10 + $0x390] sm:$0xff]
    %v473 = vld [vmem:[#allocation10 + $0x398] sm:$0xff]
    %v474 = vld [vmem:[#allocation10 + $0x3a0] sm:$0xff]
    %v475 = vld [vmem:[#allocation10 + $0x3a8] sm:$0xff]
    %v476 = vld [vmem:[#allocation10 + $0x3b0] sm:$0xff]
    %v477 = vld [vmem:[#allocation10 + $0x3b8] sm:$0xff]
    %v478 = vld [vmem:[#allocation10 + $0x3c0] sm:$0xff]
    %v479 = vld [vmem:[#allocation10 + $0x3c8] sm:$0xff]
    %v480 = vld [vmem:[#allocation10 + $0x3d0] sm:$0xff]
    %v481 = vld [vmem:[#allocation10 + $0x3d8] sm:$0xff]
    %v482 = vld [vmem:[#allocation10 + $0x3e0] sm:$0xff]
    %v483 = vld [vmem:[#allocation10 + $0x3e8] sm:$0xff]
    %v484 = vld [vmem:[#allocation10 + $0x3f0] sm:$0xff]
    %v485 = vld [vmem:[#allocation10 + $0x3f8] sm:$0xff]
    %v486 = vld [vmem:[%s8] sm:$0xf]
    %v488 = vperm.slane %v486, 0
    %v489 = vperm.slane %v486, 1
    %v490 = vperm.slane %v486, 2
    %v491 = vperm.slane %v486, 3
    %496 = vmatpush.msra.mxu0 %v418
    %497 = vmatpush.msra.mxu0 %v414
    %498 = vmatpush.msra.mxu0 %v410
    %499 = vmatpush.msra.mxu0 %v406
    %500 = vmatpush.msra.mxu0 %v402
    %501 = vmatpush.msra.mxu0 %v398
    %502 = vmatpush.msra.mxu0 %v394
    %503 = vmatpush.msra.mxu0 %v390
    %504 = vmatpush.msra.mxu0 %v386
    %505 = vmatpush.msra.mxu0 %v382
    %506 = vmatpush.msra.mxu0 %v378
    %507 = vmatpush.msra.mxu0 %v374
    %508 = vmatpush.msra.mxu0 %v370
    %509 = vmatpush.msra.mxu0 %v366
    %510 = vmatpush.msra.mxu0 %v362
    %511 = vmatpush.msra.mxu0 %v358
    %512 = vmatmul.f32.gmra.mxu0 %v357
    %v513 = vpop.f32.mrf.mxu0
    %v514 = vadd.f32 %v488, %v513
    %515 = vdwg.mxu0
    %516 = vmatpush.msra.mxu0 %v482
    %517 = vmatpush.msra.mxu0 %v478
    %518 = vmatpush.msra.mxu0 %v474
    %519 = vmatpush.msra.mxu0 %v470
    %520 = vmatpush.msra.mxu0 %v466
    %521 = vmatpush.msra.mxu0 %v462
    %522 = vmatpush.msra.mxu0 %v458
    %523 = vmatpush.msra.mxu0 %v454
    %524 = vmatpush.msra.mxu0 %v450
    %525 = vmatpush.msra.mxu0 %v446
    %526 = vmatpush.msra.mxu0 %v442
    %527 = vmatpush.msra.mxu0 %v438
    %528 = vmatpush.msra.mxu0 %v434
    %529 = vmatpush.msra.mxu0 %v430
    %530 = vmatpush.msra.mxu0 %v426
    %531 = vmatpush.msra.mxu0 %v422
    %532 = vmatmul.f32.gmra.mxu0 %v316
    %v533 = vpop.f32.mrf.mxu0
    %v534 = vadd.f32 %v514, %v533
    %535 = vdwg.mxu0
    %536 = vmatpush.msra.mxu0 %v419
    %537 = vmatpush.msra.mxu0 %v415
    %538 = vmatpush.msra.mxu0 %v411
    %539 = vmatpush.msra.mxu0 %v407
    %540 = vmatpush.msra.mxu0 %v403
    %541 = vmatpush.msra.mxu0 %v399
    %542 = vmatpush.msra.mxu0 %v395
    %543 = vmatpush.msra.mxu0 %v391
    %544 = vmatpush.msra.mxu0 %v387
    %545 = vmatpush.msra.mxu0 %v383
    %546 = vmatpush.msra.mxu0 %v379
    %547 = vmatpush.msra.mxu0 %v375
    %548 = vmatpush.msra.mxu0 %v371
    %549 = vmatpush.msra.mxu0 %v367
    %550 = vmatpush.msra.mxu0 %v363
    %551 = vmatpush.msra.mxu0 %v359
    %552 = vmatmul.f32.gmra.mxu0 %v357
    %v553 = vpop.f32.mrf.mxu0
    %v554 = vadd.f32 %v489, %v553
    %555 = vdwg.mxu0
    %556 = vmatpush.msra.mxu0 %v483
    %557 = vmatpush.msra.mxu0 %v479
    %558 = vmatpush.msra.mxu0 %v475
    %559 = vmatpush.msra.mxu0 %v471
    %560 = vmatpush.msra.mxu0 %v467
    %561 = vmatpush.msra.mxu0 %v463
    %562 = vmatpush.msra.mxu0 %v459
    %563 = vmatpush.msra.mxu0 %v455
    %564 = vmatpush.msra.mxu0 %v451
    %565 = vmatpush.msra.mxu0 %v447
    %566 = vmatpush.msra.mxu0 %v443
    %567 = vmatpush.msra.mxu0 %v439
    %568 = vmatpush.msra.mxu0 %v435
    %569 = vmatpush.msra.mxu0 %v431
    %570 = vmatpush.msra.mxu0 %v427
    %571 = vmatpush.msra.mxu0 %v423
    %572 = vmatmul.f32.gmra.mxu0 %v316
    %v573 = vpop.f32.mrf.mxu0
    %v574 = vadd.f32 %v554, %v573
    %575 = vdwg.mxu0
    %576 = vmatpush.msra.mxu0 %v420
    %577 = vmatpush.msra.mxu0 %v416
    %578 = vmatpush.msra.mxu0 %v412
    %579 = vmatpush.msra.mxu0 %v408
    %580 = vmatpush.msra.mxu0 %v404
    %581 = vmatpush.msra.mxu0 %v400
    %582 = vmatpush.msra.mxu0 %v396
    %583 = vmatpush.msra.mxu0 %v392
    %584 = vmatpush.msra.mxu0 %v388
    %585 = vmatpush.msra.mxu0 %v384
    %586 = vmatpush.msra.mxu0 %v380
    %587 = vmatpush.msra.mxu0 %v376
    %588 = vmatpush.msra.mxu0 %v372
    %589 = vmatpush.msra.mxu0 %v368
    %590 = vmatpush.msra.mxu0 %v364
    %591 = vmatpush.msra.mxu0 %v360
    %592 = vmatmul.f32.gmra.mxu0 %v357
    %v593 = vpop.f32.mrf.mxu0
    %v594 = vadd.f32 %v490, %v593
    %595 = vdwg.mxu0
    %596 = vmatpush.msra.mxu0 %v484
    %597 = vmatpush.msra.mxu0 %v480
    %598 = vmatpush.msra.mxu0 %v476
    %599 = vmatpush.msra.mxu0 %v472
    %600 = vmatpush.msra.mxu0 %v468
    %601 = vmatpush.msra.mxu0 %v464
    %602 = vmatpush.msra.mxu0 %v460
    %603 = vmatpush.msra.mxu0 %v456
    %604 = vmatpush.msra.mxu0 %v452
    %605 = vmatpush.msra.mxu0 %v448
    %606 = vmatpush.msra.mxu0 %v444
    %607 = vmatpush.msra.mxu0 %v440
    %608 = vmatpush.msra.mxu0 %v436
    %609 = vmatpush.msra.mxu0 %v432
    %610 = vmatpush.msra.mxu0 %v428
    %611 = vmatpush.msra.mxu0 %v424
    %612 = vmatmul.f32.gmra.mxu0 %v316
    %v613 = vpop.f32.mrf.mxu0
    %v614 = vadd.f32 %v594, %v613
    %615 = vdwg.mxu0
    %616 = vmatpush.msra.mxu0 %v421
    %617 = vmatpush.msra.mxu0 %v417
    %618 = vmatpush.msra.mxu0 %v413
    %619 = vmatpush.msra.mxu0 %v409
    %620 = vmatpush.msra.mxu0 %v405
    %621 = vmatpush.msra.mxu0 %v401
    %622 = vmatpush.msra.mxu0 %v397
    %623 = vmatpush.msra.mxu0 %v393
    %624 = vmatpush.msra.mxu0 %v389
    %625 = vmatpush.msra.mxu0 %v385
    %626 = vmatpush.msra.mxu0 %v381
    %627 = vmatpush.msra.mxu0 %v377
    %628 = vmatpush.msra.mxu0 %v373
    %629 = vmatpush.msra.mxu0 %v369
    %630 = vmatpush.msra.mxu0 %v365
    %631 = vmatpush.msra.mxu0 %v361
    %632 = vmatmul.f32.gmra.mxu0 %v357
    %v633 = vpop.f32.mrf.mxu0
    %v634 = vadd.f32 %v491, %v633
    %635 = vdwg.mxu0
    %636 = vmatpush.msra.mxu0 %v485
    %637 = vmatpush.msra.mxu0 %v481
    %638 = vmatpush.msra.mxu0 %v477
    %639 = vmatpush.msra.mxu0 %v473
    %640 = vmatpush.msra.mxu0 %v469
    %641 = vmatpush.msra.mxu0 %v465
    %642 = vmatpush.msra.mxu0 %v461
    %643 = vmatpush.msra.mxu0 %v457
    %644 = vmatpush.msra.mxu0 %v453
    %645 = vmatpush.msra.mxu0 %v449
    %646 = vmatpush.msra.mxu0 %v445
    %647 = vmatpush.msra.mxu0 %v441
    %648 = vmatpush.msra.mxu0 %v437
    %649 = vmatpush.msra.mxu0 %v433
    %650 = vmatpush.msra.mxu0 %v429
    %651 = vmatpush.msra.mxu0 %v425
    %652 = vmatmul.f32.gmra.mxu0 %v316
    %v653 = vpop.f32.mrf.mxu0
    %v654 = vadd.f32 %v634, %v653
    %655 = vdwg.mxu0
    %v656 = vxor.u32 %v534, 2147483648
    %v657 = vxor.u32 %v574, 2147483648
    %v658 = vxor.u32 %v654, 2147483648
    %v659 = vmul.f32 %v656, 1.442695
    %v660 = vpow.pop %v659
    %v661 = vmul.f32 %v657, 1.442695
    %v662 = vpow.pop %v661
    %v663 = vmul.f32 %v658, 1.442695
    %v664 = vpow.pop %v663
    %v665 = vadd.f32 %v660, 1.0
    %v666 = vadd.f32 %v662, 1.0
    %v667 = vadd.f32 %v664, 1.0
    %v668 = vrcp.pop %v665
    %v669 = vmul.f32 %v665, %v668
    %v670 = vsub.f32 1.0, %v669
    %v671 = vmul.f32 %v668, %v670
    %v672 = vadd.f32 %v668, %v671
    %vm673 = vweird.f32 %v665
    %vm674 = vweird.f32 %v668
    %vm675 = vmor %vm673, %vm674
    %v676 = vsel %vm675, %v668, %v672
    %v677 = vand.u32 2147483647, %v665
    %vm678 = vcmp.eq.f32.partialorder %v677, 8.507059e+37
    %v679 = vand.u32 %v665, 2147483648
    %v680 = vor.u32 1.1754944e-38, %v679
    %v681 = vsel %vm678, %v680, %v676
    %v682 = vmul.f32 1.0, %v681
    %v683 = vrcp.pop %v666
    %v684 = vmul.f32 %v666, %v683
    %v685 = vsub.f32 1.0, %v684
    %v686 = vmul.f32 %v683, %v685
    %v687 = vadd.f32 %v683, %v686
    %vm688 = vweird.f32 %v666
    %vm689 = vweird.f32 %v683
    %vm690 = vmor %vm688, %vm689
    %v691 = vsel %vm690, %v683, %v687
    %v692 = vand.u32 2147483647, %v666
    %vm693 = vcmp.eq.f32.partialorder %v692, 8.507059e+37
    %v694 = vand.u32 %v666, 2147483648
    %v695 = vor.u32 1.1754944e-38, %v694
    %v696 = vsel %vm693, %v695, %v691
    %v697 = vmul.f32 1.0, %v696
    %v698 = vrcp.pop %v667
    %v699 = vmul.f32 %v667, %v698
    %v700 = vsub.f32 1.0, %v699
    %v701 = vmul.f32 %v698, %v700
    %v702 = vadd.f32 %v698, %v701
    %vm703 = vweird.f32 %v667
    %vm704 = vweird.f32 %v698
    %vm705 = vmor %vm703, %vm704
    %v706 = vsel %vm705, %v698, %v702
    %v707 = vand.u32 2147483647, %v667
    %vm708 = vcmp.eq.f32.partialorder %v707, 8.507059e+37
    %v709 = vand.u32 %v667, 2147483648
    %v710 = vor.u32 1.1754944e-38, %v709
    %v711 = vsel %vm708, %v710, %v706
    %v712 = vmul.f32 1.0, %v711
    %v713 = vtanh.pop %v614
    %v714 = vmul.f32 %v697, %v112
    %v715 = vmul.f32 %v682, %v713
    %v716 = vadd.f32 %v714, %v715
    %v717 = vtanh.pop %v716
    %v718 = vmul.f32 %v712, %v717
    %719 = vst [vmem:[#allocation11] sm:$0xff] %v718
    %720 = vst [vmem:[#allocation12] sm:$0xff] %v716
    // Predicated region
    $region58: #{tpu_custom_call.1} parent=1 // pred_check
      _
    $region59: #{tpu_custom_call.1} parent=1 // pred_check_branch
      %722 = sbr.rel (0) target = $region61
    $region60: #{tpu_custom_call.1} parent=1 // pred_region
      %724 = vsyncadd [#allocation4], 0
      %s726 = sshll.u32 [#allocation11], 4
      %s727 = int_to_ptr.vmem [resolvable:$true] %s726
      %s728 = sshll.u32 %s9, 4
      %s729 = int_to_ptr.hbm [resolvable:$true] %s728
      %731 = dma.vmem_to_hbm [thread:$0]  %s727, 128, %s729, [#allocation4]
    $region61: #{tpu_custom_call.1} parent=1 // pred_fallthru
      _
    // Predicated region
    $region62: #{tpu_custom_call.1} parent=1 // pred_check
      _
    $region63: #{tpu_custom_call.1} parent=1 // pred_check_branch
      %733 = sbr.rel (0) target = $region65
    $region64: #{tpu_custom_call.1} parent=1 // pred_region
      %735 = vsyncadd [#allocation13], 0
      %s737 = sshll.u32 [#allocation12], 4
      %s738 = int_to_ptr.vmem [resolvable:$true] %s737
      %s739 = sshll.u32 %s10, 4
      %s740 = int_to_ptr.hbm [resolvable:$true] %s739
      %742 = dma.vmem_to_hbm [thread:$0]  %s738, 128, %s740, [#allocation13]
    $region65: #{tpu_custom_call.1} parent=1 // pred_fallthru
      _
    // Predicated region
    $region66: #{tpu_custom_call.1} parent=1 // pred_check
      _
    $region67: #{tpu_custom_call.1} parent=1 // pred_check_branch
      %744 = sbr.rel (0) target = $region69
    $region68: #{tpu_custom_call.1} parent=1 // pred_region
      %746 = dma.done [#allocation4], 128
    $region69: #{tpu_custom_call.1} parent=1 // pred_fallthru
      _
    // Predicated region
    $region70: #{tpu_custom_call.1} parent=1 // pred_check
      _
    $region71: #{tpu_custom_call.1} parent=1 // pred_check_branch
      %748 = sbr.rel (0) target = $region73
    $region72: #{tpu_custom_call.1} parent=1 // pred_region
      %750 = dma.done [#allocation13], 128
    $region73: #{tpu_custom_call.1} parent=1 // pred_fallthru
      _
    %751 = vsyncpa [#allocation3], 1
    %752 = vsyncpa [#allocation6], 1
    %753 = vsyncpa [#allocation9], 1
    %754 = vsyncpa [#allocation4], 1
    %755 = vsyncpa [#allocation13], 1

</llo_original>
